<compile_context>
chip_gen: v5e
topology: v5e:2x2
jax: 0.10.0
libtpu: 0.0.40
codegen_flags: <defaults>
</compile_context>

<pallas_src>
import jax
import jax.numpy as jnp
from jax import lax
from jax.experimental import pallas as pl
from jax.experimental.pallas import tpu as pltpu

LANE = 128  # lane-dense packed scalar outputs


# ----------------------------------------------------------------------------
# Tile selection
# ----------------------------------------------------------------------------
def _pick_tile_h(H, W, unit, max_tile_bytes=512 * 1024):
    """Largest divisor of H that is a multiple of `unit` and fits the VMEM budget."""
    cap = max(unit, max_tile_bytes // (4 * max(W, 1)))
    cap = min(cap, H)
    best = None
    th = unit
    while th <= cap:
        if H % th == 0:
            best = th
        th += unit
    return best if best is not None else H


# ----------------------------------------------------------------------------
# Kernel 1: per-image sums for the scale/shift solve
# ----------------------------------------------------------------------------
def _make_sums_kernel(TH, W):
    def kernel(p_ref, t_ref, m_ref, out_ref):
        h = pl.program_id(1)
        p = p_ref[0]
        t = t_ref[0]
        m = m_ref[0]
        mp = m * p
        # sublane partial reductions first, one cross-lane reduce at the end
        parts = jnp.concatenate(
            [
                jnp.sum(mp * p, axis=0, keepdims=True),   # a00
                jnp.sum(mp, axis=0, keepdims=True),       # a01
                jnp.sum(m, axis=0, keepdims=True),        # a11
                jnp.sum(mp * t, axis=0, keepdims=True),   # b0
                jnp.sum(m * t, axis=0, keepdims=True),    # b1
                jnp.zeros((3, W), jnp.float32),
            ],
            axis=0,
        )                                                 # (8, W)
        acc = jnp.sum(parts, axis=-1, keepdims=True)      # (8, 1)

        @pl.when(h == 0)
        def _():
            out_ref[...] = jnp.zeros_like(out_ref)

        out_ref[0] += jnp.broadcast_to(acc, (8, LANE))

    return kernel


# ----------------------------------------------------------------------------
# Kernel 2: fused prediction_ssi + MSE + multi-scale gradient reductions
# ----------------------------------------------------------------------------
def _make_fused_kernel(TH, W, NH, scales, nrows, max_step):
    def kernel(p_ref, t_ref, m_ref, sc_ref, sh_ref, out_ref, dcar_ref, mcar_ref):
        b = pl.program_id(0)
        h = pl.program_id(1)

        p = p_ref[0]
        t = t_ref[0]
        m = m_ref[0]
        sc = sc_ref[b]
        sh = sh_ref[b]

        res = sc * p + sh - t                 # prediction_ssi - target
        d = m * res                           # masked residual ("diff")

        row_ids = lax.broadcasted_iota(jnp.int32, (TH, W), 0)
        col_ids = lax.broadcasted_iota(jnp.int32, (TH, W), 1)
        rc_or = row_ids | col_ids

        # row 0: masked MSE partial (d*res == m*res*res)
        parts = [jnp.sum(d * res, axis=0, keepdims=True)]

        grad_parts = []
        msub_parts = []
        for s in range(scales):
            step = 1 << s
            if step == 1:
                ms = m                                           # scale-0 subgrid = full grid
            else:
                ms = jnp.where((rc_or & (step - 1)) == 0, m, 0.0)  # mask restricted to subgrid
                msub_parts.append(jnp.sum(ms, axis=0, keepdims=True))

            g = None
            if step < W:   # x-direction pairs (always fully inside the tile)
                mx = jnp.where(col_ids < (W - step),
                               pltpu.roll(ms, shift=W - step, axis=1), 0.0)
                gx = jnp.abs(pltpu.roll(d, shift=W - step, axis=1) - d) * mx * ms
                g = gx
            if step < TH:  # y-direction pairs fully inside the tile
                my = jnp.where(row_ids < (TH - step),
                               pltpu.roll(ms, shift=TH - step, axis=0), 0.0)
                gy = jnp.abs(pltpu.roll(d, shift=TH - step, axis=0) - d) * my * ms
                g = gy if g is None else g + gy

            if g is None:
                grad_parts.append(jnp.zeros((1, W), jnp.float32))
            else:
                grad_parts.append(jnp.sum(g, axis=0, keepdims=True))

        parts = parts + grad_parts + msub_parts
        while len(parts) < nrows:
            parts.append(jnp.zeros((1, W), jnp.float32))
        stacked = jnp.concatenate(parts, axis=0)             # (nrows, W)
        acc = jnp.sum(stacked, axis=-1, keepdims=True)       # (nrows, 1)

        @pl.when(h == 0)
        def _():
            out_ref[...] = jnp.zeros_like(out_ref)

        out_ref[0] += jnp.broadcast_to(acc, (nrows, LANE))

        if NH > 1:
            # y-direction pairs that straddle the H-tile boundary: use the carried
            # last rows of the previous tile (same batch, previous h).
            @pl.when(h > 0)
            def _():
                col1 = lax.broadcasted_iota(jnp.int32, (1, W), 1)
                d0 = d[0:1, :]
                m0 = m[0:1, :]
                for s in range(scales):
                    step = 1 << s
                    i = max_step - step
                    dp = dcar_ref[i:i + 1, :]
                    mprev = mcar_ref[i:i + 1, :]
                    contrib = jnp.where((col1 & (step - 1)) == 0,
                                        jnp.abs(d0 - dp) * m0 * mprev, 0.0)
                    val = jnp.sum(contrib)
                    out_ref[0, 1 + s:2 + s, :] += val

            # stash this tile's last rows for the next H tile
            dcar_ref[...] = d[TH - max_step:, :]
            mcar_ref[...] = m[TH - max_step:, :]

    return kernel


# ----------------------------------------------------------------------------
# pallas_call wrappers
# ----------------------------------------------------------------------------
def _img_spec(TH, W):
    return pl.BlockSpec((1, TH, W), lambda b, h: (b, h, 0))


def _run_sums(p, t, m, TH):
    B, H, W = p.shape
    NH = H // TH
    out = pl.pallas_call(
        _make_sums_kernel(TH, W),
        out_shape=jax.ShapeDtypeStruct((B, 8, LANE), jnp.float32),
        grid=(B, NH),
        in_specs=[_img_spec(TH, W)] * 3,
        out_specs=pl.BlockSpec((1, 8, LANE), lambda b, h: (b, 0, 0)),
        compiler_params=pltpu.CompilerParams(
            dimension_semantics=("parallel", "arbitrary")),
    )(p, t, m)
    return out[:, :, 0]                                      # (B, 8)


def _run_fused(p, t, m, scale, shift, TH, scales, nrows, max_step):
    B, H, W = p.shape
    NH = H // TH
    smem = pl.BlockSpec(memory_space=pltpu.MemorySpace.SMEM)
    out = pl.pallas_call(
        _make_fused_kernel(TH, W, NH, scales, nrows, max_step),
        out_shape=jax.ShapeDtypeStruct((B, nrows, LANE), jnp.float32),
        grid=(B, NH),
        in_specs=[_img_spec(TH, W)] * 3 + [smem, smem],
        out_specs=pl.BlockSpec((1, nrows, LANE), lambda b, h: (b, 0, 0)),
        scratch_shapes=[
            pltpu.VMEM((max_step, W), jnp.float32),          # carried residual rows
            pltpu.VMEM((max_step, W), jnp.float32),          # carried mask rows
        ],
        compiler_params=pltpu.CompilerParams(
            dimension_semantics=("parallel", "arbitrary")),
    )(p, t, m, scale, shift)
    return out[:, :, 0]                                      # (B, nrows)


# ----------------------------------------------------------------------------
# Full forward pass (ScaleAndShiftInvariantLoss.forward, batch-based reduction)
# ----------------------------------------------------------------------------
def scale_and_shift_invariant_loss(prediction, target, mask, alpha=0.5, scales=4,
                                   tile_h=None):
    prediction = prediction.astype(jnp.float32)
    target = target.astype(jnp.float32)
    mask = mask.astype(jnp.float32)
    B, H, W = prediction.shape

    max_step = 1 << (scales - 1)
    unit = max(8, max_step)
    TH = _pick_tile_h(H, W, unit) if tile_h is None else int(tile_h)
    if TH != H and (H % TH != 0 or TH % unit != 0):
        raise ValueError(f"tile_h={TH} must divide H={H} and be a multiple of {unit}")
    nrows = max(8, ((2 * scales + 7) // 8) * 8)

    # --- compute_scale_and_shift (per-image 2x2 solve; scalar glue in JAX) ---
    sums = _run_sums(prediction, target, mask, TH)
    a00, a01, a11, b0, b1 = (sums[:, i] for i in range(5))
    det = a00 * a11 - a01 * a01
    valid = det != 0
    safe_det = jnp.where(valid, det, 1.0)
    scale = jnp.where(valid, (a11 * b0 - a01 * b1) / safe_det, 0.0)
    shift = jnp.where(valid, (-a01 * b0 + a00 * b1) / safe_det, 0.0)

    # --- fused MSE + multi-scale gradient reductions (single full-res pass) ---
    packed = _run_fused(prediction, target, mask, scale, shift,
                        TH, scales, nrows, max_step)

    mse_b = packed[:, 0]
    div = jnp.sum(2.0 * a11)                                  # M at full res == a11
    total = jnp.where(div != 0, jnp.sum(mse_b) / div, 0.0)

    if alpha > 0:
        for s in range(scales):
            g_b = packed[:, 1 + s]
            Ms = a11 if s == 0 else packed[:, scales + s]
            divg = jnp.sum(Ms)
            total = total + alpha * jnp.where(divg != 0, jnp.sum(g_b) / divg, 0.0)
    return total


# ----------------------------------------------------------------------------
# Pure-JAX reference (mirrors the PyTorch code) for validation
# ----------------------------------------------------------------------------
def _reference_loss(p, t, m, alpha=0.5, scales=4):
    a00 = jnp.sum(m * p * p, (1, 2))
    a01 = jnp.sum(m * p, (1, 2))
    a11 = jnp.sum(m, (1, 2))
    b0 = jnp.sum(m * p * t, (1, 2))
    b1 = jnp.sum(m * t, (1, 2))
    det = a00 * a11 - a01 * a01
    sd = jnp.where(det != 0, det, 1.0)
    x0 = jnp.where(det != 0, (a11 * b0 - a01 * b1) / sd, 0.0)
    x1 = jnp.where(det != 0, (-a01 * b0 + a00 * b1) / sd, 0.0)
    pred = x0[:, None, None] * p + x1[:, None, None]

    M = jnp.sum(m, (1, 2))
    res = pred - t
    il = jnp.sum(m * res * res, (1, 2))
    div = jnp.sum(2.0 * M)
    total = jnp.where(div != 0, jnp.sum(il) / div, 0.0)

    for s in range(scales):
        step = 2 ** s
        pp, tt, mm = pred[:, ::step, ::step], t[:, ::step, ::step], m[:, ::step, ::step]
        Ms = jnp.sum(mm, (1, 2))
        diff = mm * (pp - tt)
        gx = jnp.abs(diff[:, :, 1:] - diff[:, :, :-1]) * (mm[:, :, 1:] * mm[:, :, :-1])
        gy = jnp.abs(diff[:, 1:, :] - diff[:, :-1, :]) * (mm[:, 1:, :] * mm[:, :-1, :])
        il = jnp.sum(gx, (1, 2)) + jnp.sum(gy, (1, 2))
        divg = jnp.sum(Ms)
        total = total + alpha * jnp.where(divg != 0, jnp.sum(il) / divg, 0.0)
    return total


if __name__ == "__main__":
    def make_inputs(key, B, H, W):
        k1, k2, k3 = jax.random.split(key, 3)
        p = jax.random.normal(k1, (B, H, W), dtype=jnp.float32)
        t = jax.random.normal(k2, (B, H, W), dtype=jnp.float32) * 0.5 + 1.0
        m = (jax.random.uniform(k3, (B, H, W)) < 0.8).astype(jnp.float32)
        return p, t, m

    # Config 1: multi H-tile path (4 tiles of 8 rows -> exercises the boundary carry).
    p1, t1, m1 = make_inputs(jax.random.PRNGKey(0), 2, 32, 128)
    out1 = jax.block_until_ready(
        scale_and_shift_invariant_loss(p1, t1, m1, alpha=0.5, scales=4, tile_h=8))
    ref1 = jax.block_until_ready(_reference_loss(p1, t1, m1, alpha=0.5, scales=4))
    assert jnp.allclose(out1, ref1, rtol=1e-4, atol=1e-5), (out1, ref1)

    # Config 2: single-tile path with automatic tile selection.
    p2, t2, m2 = make_inputs(jax.random.PRNGKey(1), 1, 16, 256)
    out2 = jax.block_until_ready(
        scale_and_shift_invariant_loss(p2, t2, m2, alpha=0.5, scales=4))
    ref2 = jax.block_until_ready(_reference_loss(p2, t2, m2, alpha=0.5, scales=4))
    assert jnp.allclose(out2, ref2, rtol=1e-4, atol=1e-5), (out2, ref2)

    print("KERNEL_OK")
</pallas_src>

<mosaic_0001>
module attributes {stable_mosaic.version = 11 : i64} {
  func.func @kernel(%arg0: i32, %arg1: i32, %arg2: memref<1x8x128xf32, #tpu.memory_space<vmem>>, %arg3: memref<1x8x128xf32, #tpu.memory_space<vmem>>, %arg4: memref<1x8x128xf32, #tpu.memory_space<vmem>>, %arg5: memref<1x8x128xf32, #tpu.memory_space<vmem>>) attributes {dimension_semantics = [#tpu.dimension_semantics<parallel>, #tpu.dimension_semantics<arbitrary>], iteration_bounds = array<i64: 2, 4>, scalar_prefetch = 0 : i64, scratch_operands = 0 : i64, tpu.core_type = #tpu.core_type<tc>, window_params = [{transform_indices = @transform_0, window_bounds = array<i64: 1, 8, 128>}, {transform_indices = @transform_1, window_bounds = array<i64: 1, 8, 128>}, {transform_indices = @transform_2, window_bounds = array<i64: 1, 8, 128>}, {transform_indices = @transform_3, window_bounds = array<i64: 1, 8, 128>}]} {
    %c0 = arith.constant 0 : index
    %c0_0 = arith.constant 0 : index
    %c0_1 = arith.constant 0 : index
    %0 = vector.load %arg2[%c0, %c0_0, %c0_1] : memref<1x8x128xf32, #tpu.memory_space<vmem>>, vector<1x8x128xf32>
    %1 = vector.shape_cast %0 : vector<1x8x128xf32> to vector<8x128xf32>
    %c0_2 = arith.constant 0 : index
    %c0_3 = arith.constant 0 : index
    %c0_4 = arith.constant 0 : index
    %2 = vector.load %arg3[%c0_2, %c0_3, %c0_4] : memref<1x8x128xf32, #tpu.memory_space<vmem>>, vector<1x8x128xf32>
    %3 = vector.shape_cast %2 : vector<1x8x128xf32> to vector<8x128xf32>
    %c0_5 = arith.constant 0 : index
    %c0_6 = arith.constant 0 : index
    %c0_7 = arith.constant 0 : index
    %4 = vector.load %arg4[%c0_5, %c0_6, %c0_7] : memref<1x8x128xf32, #tpu.memory_space<vmem>>, vector<1x8x128xf32>
    %5 = vector.shape_cast %4 : vector<1x8x128xf32> to vector<8x128xf32>
    %6 = arith.mulf %5, %1 : vector<8x128xf32>
    %7 = arith.mulf %6, %1 : vector<8x128xf32>
    %cst = arith.constant dense<0.000000e+00> : vector<128xf32>
    %8 = vector.multi_reduction <add>, %7, %cst [0] : vector<8x128xf32> to vector<128xf32>
    %9 = vector.shape_cast %8 : vector<128xf32> to vector<1x128xf32>
    %cst_8 = arith.constant dense<0.000000e+00> : vector<128xf32>
    %10 = vector.multi_reduction <add>, %6, %cst_8 [0] : vector<8x128xf32> to vector<128xf32>
    %11 = vector.shape_cast %10 : vector<128xf32> to vector<1x128xf32>
    %cst_9 = arith.constant dense<0.000000e+00> : vector<128xf32>
    %12 = vector.multi_reduction <add>, %5, %cst_9 [0] : vector<8x128xf32> to vector<128xf32>
    %13 = vector.shape_cast %12 : vector<128xf32> to vector<1x128xf32>
    %14 = arith.mulf %6, %3 : vector<8x128xf32>
    %cst_10 = arith.constant dense<0.000000e+00> : vector<128xf32>
    %15 = vector.multi_reduction <add>, %14, %cst_10 [0] : vector<8x128xf32> to vector<128xf32>
    %16 = vector.shape_cast %15 : vector<128xf32> to vector<1x128xf32>
    %17 = arith.mulf %5, %3 : vector<8x128xf32>
    %cst_11 = arith.constant dense<0.000000e+00> : vector<128xf32>
    %18 = vector.multi_reduction <add>, %17, %cst_11 [0] : vector<8x128xf32> to vector<128xf32>
    %19 = vector.shape_cast %18 : vector<128xf32> to vector<1x128xf32>
    %cst_12 = arith.constant 0.000000e+00 : f32
    %20 = vector.broadcast %cst_12 : f32 to vector<3x128xf32>
    %21 = tpu.concatenate %9, %11, %13, %16, %19, %20 in 0 : vector<1x128xf32>, vector<1x128xf32>, vector<1x128xf32>, vector<1x128xf32>, vector<1x128xf32>, vector<3x128xf32> -> vector<8x128xf32>
    %cst_13 = arith.constant dense<0.000000e+00> : vector<8xf32>
    %22 = vector.multi_reduction <add>, %21, %cst_13 [1] : vector<8x128xf32> to vector<8xf32>
    %23 = vector.shape_cast %22 : vector<8xf32> to vector<8x1xf32>
    %c0_i32 = arith.constant 0 : i32
    %24 = arith.cmpi eq, %arg1, %c0_i32 : i32
    %25 = arith.extui %24 : i1 to i32
    %c0_i32_14 = arith.constant 0 : i32
    %26 = arith.cmpi ne, %25, %c0_i32_14 : i32
    scf.if %26 {
      %cst_21 = arith.constant 0.000000e+00 : f32
      %35 = vector.broadcast %cst_21 : f32 to vector<1x8x128xf32>
      %c0_22 = arith.constant 0 : index
      %c0_23 = arith.constant 0 : index
      %c0_24 = arith.constant 0 : index
      %36 = vector.load %arg5[%c0_22, %c0_23, %c0_24] : memref<1x8x128xf32, #tpu.memory_space<vmem>>, vector<1x8x128xf32>
      tpu.vector_store %arg5[%c0_22, %c0_23, %c0_24], %35 {strides = array<i32>} : memref<1x8x128xf32, #tpu.memory_space<vmem>>, vector<1x8x128xf32>,
    } else {
    }
    %c0_15 = arith.constant 0 : index
    %c0_16 = arith.constant 0 : index
    %c0_17 = arith.constant 0 : index
    %27 = vector.load %arg5[%c0_15, %c0_16, %c0_17] : memref<1x8x128xf32, #tpu.memory_space<vmem>>, vector<1x8x128xf32>
    %28 = vector.shape_cast %27 : vector<1x8x128xf32> to vector<8x128xf32>
    %29 = vector.shape_cast %23 : vector<8x1xf32> to vector<8x1xf32>
    %30 = vector.broadcast %29 : vector<8x1xf32> to vector<8x128xf32>
    %31 = arith.addf %28, %30 : vector<8x128xf32>
    %c0_18 = arith.constant 0 : index
    %c0_19 = arith.constant 0 : index
    %c0_20 = arith.constant 0 : index
    %32 = vector.load %arg5[%c0_18, %c0_19, %c0_20] : memref<1x8x128xf32, #tpu.memory_space<vmem>>, vector<1x8x128xf32>
    %33 = vector.shape_cast %32 : vector<1x8x128xf32> to vector<8x128xf32>
    %34 = vector.shape_cast %31 : vector<8x128xf32> to vector<1x8x128xf32>
    tpu.vector_store %arg5[%c0_18, %c0_19, %c0_20], %34 {strides = array<i32>} : memref<1x8x128xf32, #tpu.memory_space<vmem>>, vector<1x8x128xf32>,
    return
  }
  func.func @transform_0(%arg0: i32, %arg1: i32) -> (i32, i32, i32) {
    %c0_i32 = arith.constant 0 : i32
    %c0_i32_0 = arith.constant 0 : i32
    return %arg0, %arg1, %c0_i32 : i32, i32, i32
  }
  func.func @transform_1(%arg0: i32, %arg1: i32) -> (i32, i32, i32) {
    %c0_i32 = arith.constant 0 : i32
    %c0_i32_0 = arith.constant 0 : i32
    return %arg0, %arg1, %c0_i32 : i32, i32, i32
  }
  func.func @transform_2(%arg0: i32, %arg1: i32) -> (i32, i32, i32) {
    %c0_i32 = arith.constant 0 : i32
    %c0_i32_0 = arith.constant 0 : i32
    return %arg0, %arg1, %c0_i32 : i32, i32, i32
  }
  func.func @transform_3(%arg0: i32, %arg1: i32) -> (i32, i32, i32) {
    %c0_i32 = arith.constant 0 : i32
    %c0_i32_0 = arith.constant 0 : i32
    %c0_i32_1 = arith.constant 0 : i32
    return %arg0, %c0_i32, %c0_i32_0 : i32, i32, i32
  }
}

</mosaic_0001>

<llo_original>
// kernel: tpu_custom_call.1
$region0: #{tpu_custom_call.1}
  #allocation0 [shape = 'u32[]', space=smem, size = 0x4, offset = 0x4, fixed_abs, tag = 'smem constant byte address 0x4 - core index']
  #allocation1 [shape = 'u32[72,128]{1,0:T(1,128)}', space=vmem, size = 0x9000, scoped, tag = 'internal scratch']
  %s0 = inlined_call_operand.hbm [shape: f32[2,32,128], index: 0, kind: input, shape index: {}]
  %s1 = inlined_call_operand.hbm [shape: f32[2,32,128], index: 1, kind: input, shape index: {}]
  %s2 = inlined_call_operand.hbm [shape: f32[2,32,128], index: 2, kind: input, shape index: {}]
  %s3 = inlined_call_operand.hbm [shape: f32[2,8,128], index: 3, kind: output, shape index: {}]
  %s4 = sld [smem:[#allocation0]]
  $region61: #{tpu_custom_call.1} parent=0
    _
  %s6 = ssub.s32 1, %s4
  %s7 = scalar_select 0, %s6, %s4
  $region1: #{tpu_custom_call.1} parent=0
    #allocation2 [shape = 'u8[8192]{0}', space=vmem, size = 0x2000, scoped, tag = 'input window, operand 0']
    #allocation3 [shape = 's32[2]{0}', space=sflag, size = 0x8, scoped, tag = 'scoped memory for tpu_custom_call.1']
    #allocation4 [shape = 's32[2]{0}', space=sflag, size = 0x8, scoped, tag = 'scoped memory for tpu_custom_call.1']
    #allocation5 [shape = 'u8[8192]{0}', space=vmem, size = 0x2000, scoped, tag = 'input window, operand 1']
    #allocation6 [shape = 's32[2]{0}', space=sflag, size = 0x8, scoped, tag = 'scoped memory for tpu_custom_call.1']
    #allocation7 [shape = 'u8[8192]{0}', space=vmem, size = 0x2000, scoped, tag = 'input window, operand 2']
    #allocation8 [shape = 'u8[8192]{0}', space=vmem, size = 0x2000, scoped, tag = 'output window, operand 0']
    %8 = vsyncpa [#allocation3], 0
    %s9 = scalar_lea.sflag [#allocation3], 1
    %10 = vsyncpa %s9, 0
    %11 = vsyncpa [#allocation6], 0
    %s12 = scalar_lea.sflag [#allocation6], 1
    %13 = vsyncpa %s12, 0
    %14 = vsyncpa [#allocation4], 0
    %s15 = scalar_lea.sflag [#allocation4], 1
    %16 = vsyncpa %s15, 0
    loop: start=0, step=1, limit=10
    $region2: #{tpu_custom_call.1} parent=1 // loop_pre_header
      _
    $region3: #{tpu_custom_call.1} parent=1 // loop_header
      %s18 = sphi 0, %s22
      %p19 = scmp.ge.s32.totalorder %s18, 10
      %s25 = sphi 0, %s37
      %s26 = sphi 0, %s33
      %s27 = sphi 0, %s25
      %s28 = sphi 0, %s26
      %s29 = sphi 0, %s27
      %s30 = sphi 0, %s28
      %s42 = sphi 0, %s44
      %s45 = sphi 0, %s42
      %s46 = sphi 0, %s45
      %s62 = sphi 0, %s46
      %s70 = sphi 0, %s72
      %s73 = sphi 0, %s70
      %s74 = sphi 0, %s73
      %s90 = sphi 0, %s74
      %s98 = sphi 0, %s100
      %s101 = sphi 0, %s98
      %s102 = sphi 0, %s101
      %s118 = sphi 0, %s102
      %s124 = sphi 0, %s126
      %s127 = sphi 0, %s124
      %s128 = sphi 0, %s127
      %s144 = sphi 0, %s128
    $region4: #{tpu_custom_call.1} parent=1 // loop_header_branch
      %21 = sbr.rel (%p19) target = $region8
    $region5: #{tpu_custom_call.1} parent=1 // loop_body
      %s23 = ssub.s32 %s18, 1
      %s24 = ssub.s32 %s18, 2
      %s31 = sadd.s32 1, %s26
      %p32 = scmp.ge.s32.totalorder %s31, 4
      %s33 = scalar_select %p32, 0, %s31
      %s34 = sadd.s32 1, %s25
      %s35 = scalar_select %p32, %s34, %s25
      %p36 = scmp.ge.s32.totalorder %s35, 2
      %s37 = scalar_select %p36, 0, %s35
      %s38 = ssub.s32 %s25, %s37
      %s39 = ssub.s32 %s26, %s33
      %s40 = sor.u32 %s38, %s39
      %p41 = scmp.eq.s32.totalorder %s40, 0
      %s43 = sadd.s32 %s42, 1
      %s44 = scalar_select %p41, %s42, %s43
      %p47 = pneg %p41
      %p48 = scmp.eq.s32.totalorder %s18, 7
      %p49 = por %p47, %p48
      %p50 = scmp.ne.s32.totalorder %s42, %s45
      %p51 = scmp.eq.s32.totalorder %s18, 0
      %p52 = por %p50, %p51
      %p53 = scmp.ne.s32.totalorder %s42, %s45
      %p54 = scmp.eq.s32.totalorder %s23, 7
      %p55 = por %p53, %p54
      %p56 = scmp.ne.s32.totalorder %s45, %s46
      %p57 = scmp.eq.s32.totalorder %s23, 0
      %p58 = por %p56, %p57
      %p59 = scmp.ne.s32.totalorder %s45, %s46
      %p60 = scmp.eq.s32.totalorder %s24, 7
      %p61 = por %p59, %p60
      %p63 = scmp.ne.s32.totalorder %s46, %s62
      %p64 = scmp.eq.s32.totalorder %s24, 0
      %p65 = por %p63, %p64
      %s66 = ssub.s32 %s25, %s37
      %s67 = ssub.s32 %s26, %s33
      %s68 = sor.u32 %s66, %s67
      %p69 = scmp.eq.s32.totalorder %s68, 0
      %s71 = sadd.s32 %s70, 1
      %s72 = scalar_select %p69, %s70, %s71
      %p75 = pneg %p69
      %p76 = scmp.eq.s32.totalorder %s18, 7
      %p77 = por %p75, %p76
      %p78 = scmp.ne.s32.totalorder %s70, %s73
      %p79 = scmp.eq.s32.totalorder %s18, 0
      %p80 = por %p78, %p79
      %p81 = scmp.ne.s32.totalorder %s70, %s73
      %p82 = scmp.eq.s32.totalorder %s23, 7
      %p83 = por %p81, %p82
      %p84 = scmp.ne.s32.totalorder %s73, %s74
      %p85 = scmp.eq.s32.totalorder %s23, 0
      %p86 = por %p84, %p85
      %p87 = scmp.ne.s32.totalorder %s73, %s74
      %p88 = scmp.eq.s32.totalorder %s24, 7
      %p89 = por %p87, %p88
      %p91 = scmp.ne.s32.totalorder %s74, %s90
      %p92 = scmp.eq.s32.totalorder %s24, 0
      %p93 = por %p91, %p92
      %s94 = ssub.s32 %s25, %s37
      %s95 = ssub.s32 %s26, %s33
      %s96 = sor.u32 %s94, %s95
      %p97 = scmp.eq.s32.totalorder %s96, 0
      %s99 = sadd.s32 %s98, 1
      %s100 = scalar_select %p97, %s98, %s99
      %p103 = pneg %p97
      %p104 = scmp.eq.s32.totalorder %s18, 7
      %p105 = por %p103, %p104
      %p106 = scmp.ne.s32.totalorder %s98, %s101
      %p107 = scmp.eq.s32.totalorder %s18, 0
      %p108 = por %p106, %p107
      %p109 = scmp.ne.s32.totalorder %s98, %s101
      %p110 = scmp.eq.s32.totalorder %s23, 7
      %p111 = por %p109, %p110
      %p112 = scmp.ne.s32.totalorder %s101, %s102
      %p113 = scmp.eq.s32.totalorder %s23, 0
      %p114 = por %p112, %p113
      %p115 = scmp.ne.s32.totalorder %s101, %s102
      %p116 = scmp.eq.s32.totalorder %s24, 7
      %p117 = por %p115, %p116
      %p119 = scmp.ne.s32.totalorder %s102, %s118
      %p120 = scmp.eq.s32.totalorder %s24, 0
      %p121 = por %p119, %p120
      %s122 = ssub.s32 %s25, %s37
      %p123 = scmp.eq.s32.totalorder %s122, 0
      %s125 = sadd.s32 %s124, 1
      %s126 = scalar_select %p123, %s124, %s125
      %p129 = pneg %p123
      %p130 = scmp.eq.s32.totalorder %s18, 7
      %p131 = por %p129, %p130
      %p132 = scmp.ne.s32.totalorder %s124, %s127
      %p133 = scmp.eq.s32.totalorder %s18, 0
      %p134 = por %p132, %p133
      %p135 = scmp.ne.s32.totalorder %s124, %s127
      %p136 = scmp.eq.s32.totalorder %s23, 7
      %p137 = por %p135, %p136
      %p138 = scmp.ne.s32.totalorder %s127, %s128
      %p139 = scmp.eq.s32.totalorder %s23, 0
      %p140 = por %p138, %p139
      %p141 = scmp.ne.s32.totalorder %s127, %s128
      %p142 = scmp.eq.s32.totalorder %s24, 7
      %p143 = por %p141, %p142
      %p145 = scmp.ne.s32.totalorder %s128, %s144
      %p146 = scmp.eq.s32.totalorder %s24, 0
      %p147 = por %p145, %p146
      %p148 = scmp.le.s32.totalorder 1, %s18
      %p149 = scmp.lt.s32.totalorder %s18, 9
      %p150 = pnand %p148, %p149
      %p151 = pneg %p150
      // Predicated region
      $region9: #{tpu_custom_call.1} parent=5 // pred_check
        _
      $region10: #{tpu_custom_call.1} parent=5 // pred_check_branch
        %153 = sbr.rel (%p150) target = $region12
      $region11: #{tpu_custom_call.1} parent=5 // pred_region
        %s154 = ssub.s32 %s18, 1
      $region12: #{tpu_custom_call.1} parent=5 // pred_fallthru
        _
      %p155 = scmp.lt.s32.totalorder %s18, 8
      // Predicated region
      $region13: #{tpu_custom_call.1} parent=5 // pred_check
        %p156 = pneg %p155
      $region14: #{tpu_custom_call.1} parent=5 // pred_check_branch
        %158 = sbr.rel (%p156) target = $region16
      $region15: #{tpu_custom_call.1} parent=5 // pred_region
        // Predicated region
        $region17: #{tpu_custom_call.1} parent=15 // pred_check
          %p159 = pneg %p52
        $region18: #{tpu_custom_call.1} parent=15 // pred_check_branch
          %161 = sbr.rel (%p159) target = $region20
        $region19: #{tpu_custom_call.1} parent=15 // pred_region
          %s162 = sand.u32 %s42, 1
          %s163 = scalar_lea.sflag [#allocation3], %s162
          %s164 = sand.u32 %s42, 1
          %s165 = smul.addr %s164, 8
          %s166 = scalar_lea.vmem [#allocation2], %s165
          %168 = vsyncadd %s163, 0
          %s169 = smul.addr %s25, 4
          %s170 = sadd.s32 %s26, %s169
          %s171 = smul.addr %s170, 8
          %s172 = scalar_lea.hbm %s0, %s171
          %s174 = sshll.u32 %s172, 4
          %s175 = int_to_ptr.hbm [resolvable:$true] %s174
          %s176 = sshll.u32 %s166, 4
          %s177 = int_to_ptr.vmem [resolvable:$true] %s176
          %179 = dma.hbm_to_vmem [thread:$0]  %s175, 128, %s177, %s163
        $region20: #{tpu_custom_call.1} parent=15 // pred_fallthru
          _
        // Predicated region
        $region21: #{tpu_custom_call.1} parent=15 // pred_check
          %p180 = pneg %p80
        $region22: #{tpu_custom_call.1} parent=15 // pred_check_branch
          %182 = sbr.rel (%p180) target = $region24
        $region23: #{tpu_custom_call.1} parent=15 // pred_region
          %s183 = sand.u32 %s18, 1
          %s184 = scalar_lea.sflag [#allocation6], %s183
          %s185 = sand.u32 %s70, 1
          %s186 = smul.addr %s185, 8
          %s187 = scalar_lea.vmem [#allocation5], %s186
          %189 = vsyncadd %s184, 0
          %s190 = smul.addr %s25, 4
          %s191 = sadd.s32 %s26, %s190
          %s192 = smul.addr %s191, 8
          %s193 = scalar_lea.hbm %s1, %s192
          %s195 = sshll.u32 %s193, 4
          %s196 = int_to_ptr.hbm [resolvable:$true] %s195
          %s197 = sshll.u32 %s187, 4
          %s198 = int_to_ptr.vmem [resolvable:$true] %s197
          %200 = dma.hbm_to_vmem [thread:$0]  %s196, 128, %s198, %s184
        $region24: #{tpu_custom_call.1} parent=15 // pred_fallthru
          _
        // Predicated region
        $region25: #{tpu_custom_call.1} parent=15 // pred_check
          %p201 = pneg %p108
        $region26: #{tpu_custom_call.1} parent=15 // pred_check_branch
          %203 = sbr.rel (%p201) target = $region28
        $region27: #{tpu_custom_call.1} parent=15 // pred_region
          %s204 = sand.u32 %s18, 1
          %s205 = scalar_lea.sflag [#allocation6], %s204
          %s206 = sand.u32 %s98, 1
          %s207 = smul.addr %s206, 8
          %s208 = scalar_lea.vmem [#allocation7], %s207
          %210 = vsyncadd %s205, 0
          %s211 = smul.addr %s25, 4
          %s212 = sadd.s32 %s26, %s211
          %s213 = smul.addr %s212, 8
          %s214 = scalar_lea.hbm %s2, %s213
          %s216 = sshll.u32 %s214, 4
          %s217 = int_to_ptr.hbm [resolvable:$true] %s216
          %s218 = sshll.u32 %s208, 4
          %s219 = int_to_ptr.vmem [resolvable:$true] %s218
          %221 = dma.hbm_to_vmem [thread:$0]  %s217, 128, %s219, %s205
        $region28: #{tpu_custom_call.1} parent=15 // pred_fallthru
          _
      $region16: #{tpu_custom_call.1} parent=5 // pred_fallthru
        _
      %p222 = scmp.le.s32.totalorder 1, %s18
      %p223 = scmp.lt.s32.totalorder %s18, 9
      %p224 = pnand %p222, %p223
      %p225 = pneg %p224
      // Predicated region
      $region29: #{tpu_custom_call.1} parent=5 // pred_check
        _
      $region30: #{tpu_custom_call.1} parent=5 // pred_check_branch
        %227 = sbr.rel (%p224) target = $region32
      $region31: #{tpu_custom_call.1} parent=5 // pred_region
        %s228 = ssub.s32 %s18, 1
        %s229 = sand.u32 %s45, 1
        %s230 = scalar_lea.sflag [#allocation3], %s229
        %s231 = sand.u32 %s45, 1
        %s232 = smul.addr %s231, 8
        %s233 = scalar_lea.vmem [#allocation2], %s232
        // Predicated region
        $region33: #{tpu_custom_call.1} parent=31 // pred_check
          %p234 = pneg %p58
        $region34: #{tpu_custom_call.1} parent=31 // pred_check_branch
          %236 = sbr.rel (%p234) target = $region36
        $region35: #{tpu_custom_call.1} parent=31 // pred_region
          %238 = dma.done %s230, 128
        $region36: #{tpu_custom_call.1} parent=31 // pred_fallthru
          _
        %s239 = sand.u32 %s23, 1
        %s240 = scalar_lea.sflag [#allocation6], %s239
        %s241 = sand.u32 %s73, 1
        %s242 = smul.addr %s241, 8
        %s243 = scalar_lea.vmem [#allocation5], %s242
        // Predicated region
        $region37: #{tpu_custom_call.1} parent=31 // pred_check
          %p244 = pneg %p86
        $region38: #{tpu_custom_call.1} parent=31 // pred_check_branch
          %246 = sbr.rel (%p244) target = $region40
        $region39: #{tpu_custom_call.1} parent=31 // pred_region
          %248 = dma.done %s240, 128
        $region40: #{tpu_custom_call.1} parent=31 // pred_fallthru
          _
        %s249 = sand.u32 %s23, 1
        %s250 = scalar_lea.sflag [#allocation6], %s249
        %s251 = sand.u32 %s101, 1
        %s252 = smul.addr %s251, 8
        %s253 = scalar_lea.vmem [#allocation7], %s252
        // Predicated region
        $region41: #{tpu_custom_call.1} parent=31 // pred_check
          %p254 = pneg %p114
        $region42: #{tpu_custom_call.1} parent=31 // pred_check_branch
          %256 = sbr.rel (%p254) target = $region44
        $region43: #{tpu_custom_call.1} parent=31 // pred_region
          %258 = dma.done %s250, 128
        $region44: #{tpu_custom_call.1} parent=31 // pred_fallthru
          _
        %s259 = sand.u32 %s45, 1
        %s260 = scalar_lea.sflag [#allocation3], %s259
        %s261 = sand.u32 %s45, 1
        %s262 = smul.addr %s261, 8
        %s263 = scalar_lea.vmem [#allocation2], %s262
        %p264 = pneg %p58
        %p265 = pneg %p55
        %s266 = sand.u32 %s23, 1
        %s267 = scalar_lea.sflag [#allocation6], %s266
        %s268 = sand.u32 %s73, 1
        %s269 = smul.addr %s268, 8
        %s270 = scalar_lea.vmem [#allocation5], %s269
        %p271 = pneg %p86
        %p272 = pneg %p83
        %s273 = sand.u32 %s23, 1
        %s274 = scalar_lea.sflag [#allocation6], %s273
        %s275 = sand.u32 %s101, 1
        %s276 = smul.addr %s275, 8
        %s277 = scalar_lea.vmem [#allocation7], %s276
        %p278 = pneg %p114
        %p279 = pneg %p111
        %p280 = pneg %p140
        %p281 = pneg %p137
        %s282 = sand.u32 %s127, 1
        %s283 = scalar_lea.sflag [#allocation4], %s282
        %s284 = sand.u32 %s127, 1
        %s285 = smul.addr %s284, 8
        %s286 = scalar_lea.vmem [#allocation8], %s285
        %v287 = vld [vmem:[%s233] sm:$0xff]
        %v288 = vld [vmem:[%s243] sm:$0xff]
        %v289 = vld [vmem:[%s253] sm:$0xff]
        %v290 = vmul.f32 %v289, %v287
        %v291 = vmul.f32 %v290, %v287
        %v292 = vrot.slane %v291, 4
        %v293 = vadd.f32 %v291, %v292
        %v294 = vrot.slane %v293, 2
        %v295 = vadd.f32 %v293, %v294
        %v296 = vrot.slane %v295, 1
        %v297 = vadd.f32 %v295, %v296
        %v298 = vrot.slane %v290, 4
        %v299 = vadd.f32 %v290, %v298
        %v300 = vrot.slane %v299, 2
        %v301 = vadd.f32 %v299, %v300
        %v302 = vrot.slane %v301, 1
        %v303 = vadd.f32 %v301, %v302
        %v304 = vrot.slane %v289, 4
        %v305 = vadd.f32 %v289, %v304
        %v306 = vrot.slane %v305, 2
        %v307 = vadd.f32 %v305, %v306
        %v308 = vrot.slane %v307, 1
        %v309 = vadd.f32 %v307, %v308
        %v310 = vmul.f32 %v290, %v288
        %v311 = vrot.slane %v310, 4
        %v312 = vadd.f32 %v310, %v311
        %v313 = vrot.slane %v312, 2
        %v314 = vadd.f32 %v312, %v313
        %v315 = vrot.slane %v314, 1
        %v316 = vadd.f32 %v314, %v315
        %v317 = vmul.f32 %v289, %v288
        %v318 = vrot.slane %v317, 4
        %v319 = vadd.f32 %v317, %v318
        %v320 = vrot.slane %v319, 2
        %v321 = vadd.f32 %v319, %v320
        %v322 = vrot.slane %v321, 1
        %v323 = vadd.f32 %v321, %v322
        %vm324 = vcmask 1040384
        %v325 = vsel %vm324, %v297, %v303
        %vm326 = vcmask 1041408
        %v327 = vsel %vm326, %v325, %v309
        %vm328 = vcmask 1042432
        %v329 = vsel %vm328, %v327, %v316
        %vm330 = vcmask 1043456
        %v331 = vsel %vm330, %v329, %v323
        %vm332 = vcmask 1044480
        %v333 = vsel %vm332, %v331, 0.0
        %334 = vadd.xlane.f32.xlu0 %v333
        %v335 = vpop.xlane.xlu0 %334
        %p336 = scmp.eq.s32.totalorder %s28, 0
        // Predicated region
        $region45: #{tpu_custom_call.1} parent=31 // pred_check
          %p337 = pneg %p336
        $region46: #{tpu_custom_call.1} parent=31 // pred_check_branch
          %339 = sbr.rel (%p337) target = $region48
        $region47: #{tpu_custom_call.1} parent=31 // pred_region
          %340 = vst [vmem:[%s286] sm:$0xff] 0.0
        $region48: #{tpu_custom_call.1} parent=31 // pred_fallthru
          _
        %v341 = vld [vmem:[%s286] sm:$0xff]
        %v342 = vadd.f32 %v341, %v335
        %343 = vst [vmem:[%s286] sm:$0xff] %v342
        %s344 = sand.u32 %s127, 1
        %s345 = scalar_lea.sflag [#allocation4], %s344
        %s346 = sand.u32 %s127, 1
        %s347 = smul.addr %s346, 8
        %s348 = scalar_lea.vmem [#allocation8], %s347
        // Predicated region
        $region49: #{tpu_custom_call.1} parent=31 // pred_check
          %p349 = pneg %p137
        $region50: #{tpu_custom_call.1} parent=31 // pred_check_branch
          %351 = sbr.rel (%p349) target = $region52
        $region51: #{tpu_custom_call.1} parent=31 // pred_region
          %353 = vsyncadd %s345, 0
          %s354 = smul.addr %s27, 8
          %s355 = scalar_lea.hbm %s3, %s354
          %s357 = sshll.u32 %s348, 4
          %s358 = int_to_ptr.vmem [resolvable:$true] %s357
          %s359 = sshll.u32 %s355, 4
          %s360 = int_to_ptr.hbm [resolvable:$true] %s359
          %362 = dma.vmem_to_hbm [thread:$0]  %s358, 128, %s360, %s345
        $region52: #{tpu_custom_call.1} parent=31 // pred_fallthru
          _
      $region32: #{tpu_custom_call.1} parent=5 // pred_fallthru
        _
      %p363 = scmp.le.s32.totalorder 2, %s18
      // Predicated region
      $region53: #{tpu_custom_call.1} parent=5 // pred_check
        %p364 = pneg %p363
      $region54: #{tpu_custom_call.1} parent=5 // pred_check_branch
        %366 = sbr.rel (%p364) target = $region56
      $region55: #{tpu_custom_call.1} parent=5 // pred_region
        %s367 = ssub.s32 %s18, 2
        // Predicated region
        $region57: #{tpu_custom_call.1} parent=55 // pred_check
          %p368 = pneg %p143
        $region58: #{tpu_custom_call.1} parent=55 // pred_check_branch
          %370 = sbr.rel (%p368) target = $region60
        $region59: #{tpu_custom_call.1} parent=55 // pred_region
          %s371 = sand.u32 %s128, 1
          %s372 = scalar_lea.sflag [#allocation4], %s371
          %s373 = sand.u32 %s128, 1
          %s374 = smul.addr %s373, 8
          %s375 = scalar_lea.vmem [#allocation8], %s374
          %377 = dma.done %s372, 128
        $region60: #{tpu_custom_call.1} parent=55 // pred_fallthru
          _
      $region56: #{tpu_custom_call.1} parent=5 // pred_fallthru
        _
    $region6: #{tpu_custom_call.1} parent=1 // loop_footer
      %s22 = sadd.s32 1, %s18
    $region7: #{tpu_custom_call.1} parent=1 // loop_footer_branch
      %17 = sbr.rel target = $region3
    $region8: #{tpu_custom_call.1} parent=1 // loop_exit
      _
    %378 = vsyncpa [#allocation3], 1
    %s379 = scalar_lea.sflag [#allocation3], 1
    %380 = vsyncpa %s379, 1
    %381 = vsyncpa [#allocation6], 1
    %s382 = scalar_lea.sflag [#allocation6], 1
    %383 = vsyncpa %s382, 1
    %384 = vsyncpa [#allocation4], 1
    %s385 = scalar_lea.sflag [#allocation4], 1
    %386 = vsyncpa %s385, 1

</llo_original>
